<compile_context>
chip_gen: v7x
topology: tpu7x:2x2x1
jax: 0.10.0
libtpu: 0.0.40
codegen_flags: <defaults>
</compile_context>

<pallas_src>
import functools

import jax
import jax.numpy as jnp
from jax.experimental import pallas as pl
from jax.experimental.pallas import tpu as pltpu


_F_PAD = 128    # lane-dense feature width for every layer
_ROW_PAD = 16   # bf16 sublane packing multiple for the node axis


# ----------------------------- Pallas kernel -------------------------------

def _activate(y, activation):
    if activation == "relu":
        return jnp.maximum(y, 0.0)
    if activation == "sigmoid":
        return jax.nn.sigmoid(y)
    if activation == "tanh":
        return jnp.tanh(y)
    return y  # no activation


def _fused_gcn_kernel(a_ref, x_ref, w_ref, b_ref, o_ref, *,
                      layer_is_gcn, activation):
    """Fused forward pass (whole network in one gridless call).

    a_ref : (Np, Np)      bf16   normalized adjacency (zero-padded, block-diag)
    x_ref : (Np, Fp)      bf16   node features (zero-padded)
    w_ref : (L, Fp, Fp)   bf16   stacked, zero-padded layer weights (in, out)
    b_ref : (L, 1, Fp)    f32    stacked, zero-padded biases
    o_ref : (Np, Fp)      bf16   lane-dense output slab (sliced/cast outside)
    """
    h = x_ref[...]
    n_layers = len(layer_is_gcn)
    for li, is_gcn in enumerate(layer_is_gcn):      # static Python unroll
        w = w_ref[li]                               # (Fp, Fp) bf16
        b = b_ref[li]                               # (1, Fp)  f32
        y = jnp.dot(h, w, preferred_element_type=jnp.float32)
        if is_gcn:
            # Read the adjacency at the dot call site (NOT hoisted above the
            # layer loop) so the (Np,Np) value's live range is bounded per GCN
            # layer and never forces spills across the whole unrolled network.
            y = jnp.dot(a_ref[...], y.astype(jnp.bfloat16),
                        preferred_element_type=jnp.float32)
        y = y + b                                   # f32 epilogue
        if li < n_layers - 1:
            y = _activate(y, activation)
            h = y.astype(jnp.bfloat16)              # bf16 MXU input next layer
        else:
            o_ref[...] = y.astype(o_ref.dtype)      # output layer: no act


# --------------------- graph / parameter packing (hoisted) -----------------

def build_gcn_adjacency(edge_index, edge_weight, num_nodes):
    """Dense D^-1/2 (A + I) D^-1/2 with PyG gcn_norm semantics
    (degree computed on the target index, self-loop weight = 1)."""
    src = edge_index[0]
    dst = edge_index[1]
    if edge_weight is None:
        edge_weight = jnp.ones(src.shape[0], dtype=jnp.float32)
    a = jnp.zeros((num_nodes, num_nodes), dtype=jnp.float32)
    a = a.at[dst, src].add(edge_weight)              # A[i, j] = w(j -> i)
    a = a + jnp.eye(num_nodes, dtype=jnp.float32)    # self loops
    deg = a.sum(axis=1)
    d_inv_sqrt = jnp.where(deg > 0.0, jax.lax.rsqrt(deg), 0.0)
    return a * d_inv_sqrt[:, None] * d_inv_sqrt[None, :]


def build_block_diag_adjacency(edge_indices, edge_weights, nodes_per_graph):
    """PyG-style graph batching: block-diagonal normalized adjacency.
    (No cross-graph edges, so per-graph normalization == whole-batch norm.)"""
    total = int(sum(nodes_per_graph))
    a = jnp.zeros((total, total), jnp.float32)
    off = 0
    for ei, ew, n in zip(edge_indices, edge_weights, nodes_per_graph):
        a = a.at[off:off + n, off:off + n].set(build_gcn_adjacency(ei, ew, n))
        off += n
    return a


def pad_adjacency(a_hat):
    """Zero-pad to a sublane multiple and cast to bf16.  Built ONCE per graph
    topology and cached by the caller (hoisted out of the inference path)."""
    n = a_hat.shape[0]
    n_pad = max(_ROW_PAD, ((n + _ROW_PAD - 1) // _ROW_PAD) * _ROW_PAD)
    a_pad = jnp.zeros((n_pad, n_pad), jnp.float32).at[:n, :n].set(a_hat)
    return a_pad.astype(jnp.bfloat16)


def _init_linear(key, in_dim, out_dim):
    # Kaiming-uniform-like init (shapes mirror nn.Linear); weight stored
    # pre-transposed as (in, out) for x @ W, bias as (1, out).
    kw, kb = jax.random.split(key)
    bound = 1.0 / jnp.sqrt(jnp.asarray(in_dim, jnp.float32))
    w = jax.random.uniform(kw, (in_dim, out_dim), jnp.float32, -bound, bound)
    b = jax.random.uniform(kb, (1, out_dim), jnp.float32, -bound, bound)
    return {"w": w, "b": b}


def build_params(key, input_size, encoder_sizes, hidden_sizes, decoder_sizes,
                 output_size):
    """Mirrors TorchGCN.build_model with conv_layer='GCN'."""
    keys = iter(jax.random.split(key, 32))
    params = {}
    params["input_layer"] = _init_linear(next(keys), input_size, encoder_sizes[0])
    params["encoder_linears"] = [
        _init_linear(next(keys), i, o)
        for i, o in zip(encoder_sizes[:-1], encoder_sizes[1:])
    ]
    params["encoder_gcn"] = _init_linear(next(keys), encoder_sizes[-1],
                                         hidden_sizes[0])
    params["convs"] = [
        _init_linear(next(keys), i, o)
        for i, o in zip(hidden_sizes[:-1], hidden_sizes[1:])
    ]
    dec = [hidden_sizes[-1]] + list(decoder_sizes)
    params["decoders"] = [
        _init_linear(next(keys), i, o) for i, o in zip(dec[:-1], dec[1:])
    ]
    params["output_layer"] = _init_linear(next(keys), dec[-1], output_size)
    return params


def _flatten_layers(params):
    """Fixed layer order (matches TorchGCN.forward) + per-layer GCN flag."""
    layers, is_gcn = [], []
    layers.append((params["input_layer"]["w"], params["input_layer"]["b"]))
    is_gcn.append(False)
    for lin in params["encoder_linears"]:
        layers.append((lin["w"], lin["b"])); is_gcn.append(False)
    layers.append((params["encoder_gcn"]["w"], params["encoder_gcn"]["b"]))
    is_gcn.append(True)
    for conv in params["convs"]:
        layers.append((conv["w"], conv["b"])); is_gcn.append(True)
    for dec in params["decoders"]:
        layers.append((dec["w"], dec["b"])); is_gcn.append(False)
    layers.append((params["output_layer"]["w"], params["output_layer"]["b"]))
    is_gcn.append(False)
    return layers, tuple(is_gcn)


def pack_layers(params, f_pad=_F_PAD):
    """Stack all (in,out) weights / biases into zero-padded (L, Fp, Fp) slabs.
    Built ONCE at init time and cached (hoisted out of the inference path)."""
    layers, is_gcn = _flatten_layers(params)
    n_layers = len(layers)
    w_stack = jnp.zeros((n_layers, f_pad, f_pad), jnp.float32)
    b_stack = jnp.zeros((n_layers, 1, f_pad), jnp.float32)
    for li, (w, b) in enumerate(layers):
        w_stack = w_stack.at[li, :w.shape[0], :w.shape[1]].set(w)
        b_stack = b_stack.at[li, :, :b.shape[1]].set(b)
    return w_stack.astype(jnp.bfloat16), b_stack, is_gcn


# ------------------------- jitted inference wrapper ------------------------

@functools.partial(jax.jit, static_argnames=("is_gcn", "activation", "out_size"))
def gcn_forward(a_pad, x, w_stack, b_stack, *, is_gcn, activation, out_size):
    """Per-call path: pad features, run the single fused Pallas kernel, slice.
    a_pad / w_stack / b_stack are precomputed at init / graph-load time."""
    n = x.shape[0]
    n_pad = a_pad.shape[0]
    n_layers = w_stack.shape[0]

    x_pad = jnp.zeros((n_pad, _F_PAD), jnp.float32)
    x_pad = x_pad.at[:n, :x.shape[1]].set(x).astype(jnp.bfloat16)

    # Advisory cost estimate (lets XLA schedule the surrounding pad/slice ops
    # sensibly around the custom call).
    n_gcn = sum(1 for g in is_gcn if g)
    flops = 2 * n_layers * n_pad * _F_PAD * _F_PAD \
        + 2 * n_gcn * n_pad * n_pad * _F_PAD
    transcendentals = 0 if activation == "relu" else (n_layers - 1) * n_pad * _F_PAD
    bytes_accessed = (a_pad.size * 2 + x_pad.size * 2 + w_stack.size * 2
                      + b_stack.size * 4 + n_pad * _F_PAD * 2)
    # Raise the scoped-VMEM limit past the 16/32 MiB defaults (v5e/v6e) so the
    # dense resident-A design keeps fitting as N grows; stays < 64 MiB (v7x).
    vmem_limit = min(60 << 20, max(32 << 20, 2 * int(bytes_accessed) + (4 << 20)))

    kernel = functools.partial(_fused_gcn_kernel,
                               layer_is_gcn=is_gcn, activation=activation)
    vmem_spec = pl.BlockSpec(memory_space=pltpu.MemorySpace.VMEM)
    out_pad = pl.pallas_call(
        kernel,
        out_shape=jax.ShapeDtypeStruct((n_pad, _F_PAD), jnp.bfloat16),
        in_specs=[vmem_spec, vmem_spec, vmem_spec, vmem_spec],
        out_specs=vmem_spec,
        compiler_params=pltpu.CompilerParams(vmem_limit_bytes=vmem_limit),
        cost_estimate=pl.CostEstimate(flops=int(flops),
                                      transcendentals=int(transcendentals),
                                      bytes_accessed=int(bytes_accessed)),
    )(a_pad, x_pad, w_stack, b_stack)

    return out_pad[:n, :out_size].astype(jnp.float32)


# ------------------------------ reference ----------------------------------

def _reference_forward(params, x, a_hat, activation="relu"):
    """Pure-JAX f32 reference (same math) for sanity checking."""
    def act(y):
        return _activate(y, activation)
    out = act(x @ params["input_layer"]["w"] + params["input_layer"]["b"])
    for lin in params["encoder_linears"]:
        out = act(out @ lin["w"] + lin["b"])
    out = act(a_hat @ (out @ params["encoder_gcn"]["w"])
              + params["encoder_gcn"]["b"])
    for conv in params["convs"]:
        out = act(a_hat @ (out @ conv["w"]) + conv["b"])
    for dec in params["decoders"]:
        out = act(out @ dec["w"] + dec["b"])
    return out @ params["output_layer"]["w"] + params["output_layer"]["b"]


# ---------------------------------- main -----------------------------------

if __name__ == "__main__":
    key = jax.random.PRNGKey(0)
    k_graphs, k_param = jax.random.split(key, 2)

    # PyG-style batch of B small power-grid-like graphs: 14 nodes, 4 features
    # per node, 20 edges each -> 112 stacked node rows (better MXU fill than a
    # single 16-row graph; per-graph semantics are unchanged).
    num_graphs = 8
    nodes_per_graph = 14
    input_size = 4
    num_edges = 20
    encoder_sizes = (32,)
    hidden_sizes = (32, 32)
    decoder_sizes = (32,)
    output_size = 1
    activation = "relu"

    xs, edge_indices, edge_weights = [], [], []
    for kg in jax.random.split(k_graphs, num_graphs):
        kf, ke, kw = jax.random.split(kg, 3)
        xs.append(jax.random.normal(kf, (nodes_per_graph, input_size),
                                    jnp.float32))
        edge_indices.append(jax.random.randint(ke, (2, num_edges), 0,
                                               nodes_per_graph, dtype=jnp.int32))
        edge_weights.append(jax.random.uniform(kw, (num_edges,), jnp.float32,
                                               0.1, 1.0))
    x = jnp.concatenate(xs, axis=0)                       # (112, 4)
    num_nodes = x.shape[0]

    params = build_params(k_param, input_size, encoder_sizes, hidden_sizes,
                          decoder_sizes, output_size)

    # Hoisted, once-per-topology / once-per-model packing (NOT per inference).
    a_hat = build_block_diag_adjacency(edge_indices, edge_weights,
                                       [nodes_per_graph] * num_graphs)
    a_pad = pad_adjacency(a_hat)                          # (112, 112) bf16
    w_stack, b_stack, is_gcn = pack_layers(params)        # (L,128,128) bf16

    out = gcn_forward(a_pad, x, w_stack, b_stack, is_gcn=is_gcn,
                      activation=activation, out_size=output_size)
    out = jax.block_until_ready(out)

    ref = _reference_forward(params, x, a_hat, activation)
    assert out.shape == (num_nodes, output_size)
    assert bool(jnp.all(jnp.isfinite(out)))
    # bf16 MXU inputs / bf16 a_hat / bf16 output slab (f32 accumulate) vs.
    # pure-f32 reference -> loose tolerance.
    assert bool(jnp.allclose(out, ref, rtol=5e-2, atol=5e-2)), (
        float(jnp.max(jnp.abs(out - ref))))

    print("KERNEL_OK")
</pallas_src>

<mosaic_0001>
module attributes {stable_mosaic.version = 11 : i64} {
  func.func @_fused_gcn_kernel(%arg0: memref<112x112xbf16, #tpu.memory_space<vmem>>, %arg1: memref<112x128xbf16, #tpu.memory_space<vmem>>, %arg2: memref<5x128x128xbf16, #tpu.memory_space<vmem>>, %arg3: memref<5x1x128xf32, #tpu.memory_space<vmem>>, %arg4: memref<112x128xbf16, #tpu.memory_space<vmem>>) attributes {dimension_semantics = [], scalar_prefetch = 0 : i64, scratch_operands = 0 : i64, tpu.core_type = #tpu.core_type<tc>} {
    %c0 = arith.constant 0 : index
    %c0_0 = arith.constant 0 : index
    %0 = vector.load %arg1[%c0, %c0_0] : memref<112x128xbf16, #tpu.memory_space<vmem>>, vector<112x128xbf16>
    %c0_1 = arith.constant 0 : index
    %c0_2 = arith.constant 0 : index
    %c0_3 = arith.constant 0 : index
    %1 = vector.load %arg2[%c0_1, %c0_2, %c0_3] : memref<5x128x128xbf16, #tpu.memory_space<vmem>>, vector<1x128x128xbf16>
    %2 = vector.shape_cast %1 : vector<1x128x128xbf16> to vector<128x128xbf16>
    %c0_4 = arith.constant 0 : index
    %c0_5 = arith.constant 0 : index
    %c0_6 = arith.constant 0 : index
    %3 = vector.load %arg3[%c0_4, %c0_5, %c0_6] : memref<5x1x128xf32, #tpu.memory_space<vmem>>, vector<1x1x128xf32>
    %4 = vector.shape_cast %3 : vector<1x1x128xf32> to vector<1x128xf32>
    %cst = arith.constant dense<0.000000e+00> : vector<112x128xf32>
    %5 = tpu.matmul %0, %2, %cst {dimension_numbers = #tpu.dot_dimension_numbers<[1], [0], [0], [1], [0, 0, 1, 1], [], []>} : vector<112x128xbf16>, vector<128x128xbf16>, vector<112x128xf32> -> vector<112x128xf32>
    %6 = vector.broadcast %4 : vector<1x128xf32> to vector<112x128xf32>
    %7 = arith.addf %5, %6 : vector<112x128xf32>
    %cst_7 = arith.constant 0.000000e+00 : f32
    %8 = vector.broadcast %cst_7 : f32 to vector<112x128xf32>
    %9 = arith.maximumf %7, %8 : vector<112x128xf32>
    %10 = arith.truncf %9 : vector<112x128xf32> to vector<112x128xbf16>
    %c1 = arith.constant 1 : index
    %c0_8 = arith.constant 0 : index
    %c0_9 = arith.constant 0 : index
    %11 = vector.load %arg2[%c1, %c0_8, %c0_9] : memref<5x128x128xbf16, #tpu.memory_space<vmem>>, vector<1x128x128xbf16>
    %12 = vector.shape_cast %11 : vector<1x128x128xbf16> to vector<128x128xbf16>
    %c1_10 = arith.constant 1 : index
    %c0_11 = arith.constant 0 : index
    %c0_12 = arith.constant 0 : index
    %13 = vector.load %arg3[%c1_10, %c0_11, %c0_12] : memref<5x1x128xf32, #tpu.memory_space<vmem>>, vector<1x1x128xf32>
    %14 = vector.shape_cast %13 : vector<1x1x128xf32> to vector<1x128xf32>
    %cst_13 = arith.constant dense<0.000000e+00> : vector<112x128xf32>
    %15 = tpu.matmul %10, %12, %cst_13 {dimension_numbers = #tpu.dot_dimension_numbers<[1], [0], [0], [1], [0, 0, 1, 1], [], []>} : vector<112x128xbf16>, vector<128x128xbf16>, vector<112x128xf32> -> vector<112x128xf32>
    %c0_14 = arith.constant 0 : index
    %c0_15 = arith.constant 0 : index
    %16 = vector.load %arg0[%c0_14, %c0_15] : memref<112x112xbf16, #tpu.memory_space<vmem>>, vector<112x112xbf16>
    %17 = arith.truncf %15 : vector<112x128xf32> to vector<112x128xbf16>
    %cst_16 = arith.constant dense<0.000000e+00> : vector<112x128xf32>
    %18 = tpu.matmul %16, %17, %cst_16 {dimension_numbers = #tpu.dot_dimension_numbers<[1], [0], [0], [1], [0, 0, 1, 1], [], []>} : vector<112x112xbf16>, vector<112x128xbf16>, vector<112x128xf32> -> vector<112x128xf32>
    %19 = vector.broadcast %14 : vector<1x128xf32> to vector<112x128xf32>
    %20 = arith.addf %18, %19 : vector<112x128xf32>
    %cst_17 = arith.constant 0.000000e+00 : f32
    %21 = vector.broadcast %cst_17 : f32 to vector<112x128xf32>
    %22 = arith.maximumf %20, %21 : vector<112x128xf32>
    %23 = arith.truncf %22 : vector<112x128xf32> to vector<112x128xbf16>
    %c2 = arith.constant 2 : index
    %c0_18 = arith.constant 0 : index
    %c0_19 = arith.constant 0 : index
    %24 = vector.load %arg2[%c2, %c0_18, %c0_19] : memref<5x128x128xbf16, #tpu.memory_space<vmem>>, vector<1x128x128xbf16>
    %25 = vector.shape_cast %24 : vector<1x128x128xbf16> to vector<128x128xbf16>
    %c2_20 = arith.constant 2 : index
    %c0_21 = arith.constant 0 : index
    %c0_22 = arith.constant 0 : index
    %26 = vector.load %arg3[%c2_20, %c0_21, %c0_22] : memref<5x1x128xf32, #tpu.memory_space<vmem>>, vector<1x1x128xf32>
    %27 = vector.shape_cast %26 : vector<1x1x128xf32> to vector<1x128xf32>
    %cst_23 = arith.constant dense<0.000000e+00> : vector<112x128xf32>
    %28 = tpu.matmul %23, %25, %cst_23 {dimension_numbers = #tpu.dot_dimension_numbers<[1], [0], [0], [1], [0, 0, 1, 1], [], []>} : vector<112x128xbf16>, vector<128x128xbf16>, vector<112x128xf32> -> vector<112x128xf32>
    %c0_24 = arith.constant 0 : index
    %c0_25 = arith.constant 0 : index
    %29 = vector.load %arg0[%c0_24, %c0_25] : memref<112x112xbf16, #tpu.memory_space<vmem>>, vector<112x112xbf16>
    %30 = arith.truncf %28 : vector<112x128xf32> to vector<112x128xbf16>
    %cst_26 = arith.constant dense<0.000000e+00> : vector<112x128xf32>
    %31 = tpu.matmul %29, %30, %cst_26 {dimension_numbers = #tpu.dot_dimension_numbers<[1], [0], [0], [1], [0, 0, 1, 1], [], []>} : vector<112x112xbf16>, vector<112x128xbf16>, vector<112x128xf32> -> vector<112x128xf32>
    %32 = vector.broadcast %27 : vector<1x128xf32> to vector<112x128xf32>
    %33 = arith.addf %31, %32 : vector<112x128xf32>
    %cst_27 = arith.constant 0.000000e+00 : f32
    %34 = vector.broadcast %cst_27 : f32 to vector<112x128xf32>
    %35 = arith.maximumf %33, %34 : vector<112x128xf32>
    %36 = arith.truncf %35 : vector<112x128xf32> to vector<112x128xbf16>
    %c3 = arith.constant 3 : index
    %c0_28 = arith.constant 0 : index
    %c0_29 = arith.constant 0 : index
    %37 = vector.load %arg2[%c3, %c0_28, %c0_29] : memref<5x128x128xbf16, #tpu.memory_space<vmem>>, vector<1x128x128xbf16>
    %38 = vector.shape_cast %37 : vector<1x128x128xbf16> to vector<128x128xbf16>
    %c3_30 = arith.constant 3 : index
    %c0_31 = arith.constant 0 : index
    %c0_32 = arith.constant 0 : index
    %39 = vector.load %arg3[%c3_30, %c0_31, %c0_32] : memref<5x1x128xf32, #tpu.memory_space<vmem>>, vector<1x1x128xf32>
    %40 = vector.shape_cast %39 : vector<1x1x128xf32> to vector<1x128xf32>
    %cst_33 = arith.constant dense<0.000000e+00> : vector<112x128xf32>
    %41 = tpu.matmul %36, %38, %cst_33 {dimension_numbers = #tpu.dot_dimension_numbers<[1], [0], [0], [1], [0, 0, 1, 1], [], []>} : vector<112x128xbf16>, vector<128x128xbf16>, vector<112x128xf32> -> vector<112x128xf32>
    %42 = vector.broadcast %40 : vector<1x128xf32> to vector<112x128xf32>
    %43 = arith.addf %41, %42 : vector<112x128xf32>
    %cst_34 = arith.constant 0.000000e+00 : f32
    %44 = vector.broadcast %cst_34 : f32 to vector<112x128xf32>
    %45 = arith.maximumf %43, %44 : vector<112x128xf32>
    %46 = arith.truncf %45 : vector<112x128xf32> to vector<112x128xbf16>
    %c4 = arith.constant 4 : index
    %c0_35 = arith.constant 0 : index
    %c0_36 = arith.constant 0 : index
    %47 = vector.load %arg2[%c4, %c0_35, %c0_36] : memref<5x128x128xbf16, #tpu.memory_space<vmem>>, vector<1x128x128xbf16>
    %48 = vector.shape_cast %47 : vector<1x128x128xbf16> to vector<128x128xbf16>
    %c4_37 = arith.constant 4 : index
    %c0_38 = arith.constant 0 : index
    %c0_39 = arith.constant 0 : index
    %49 = vector.load %arg3[%c4_37, %c0_38, %c0_39] : memref<5x1x128xf32, #tpu.memory_space<vmem>>, vector<1x1x128xf32>
    %50 = vector.shape_cast %49 : vector<1x1x128xf32> to vector<1x128xf32>
    %cst_40 = arith.constant dense<0.000000e+00> : vector<112x128xf32>
    %51 = tpu.matmul %46, %48, %cst_40 {dimension_numbers = #tpu.dot_dimension_numbers<[1], [0], [0], [1], [0, 0, 1, 1], [], []>} : vector<112x128xbf16>, vector<128x128xbf16>, vector<112x128xf32> -> vector<112x128xf32>
    %52 = vector.broadcast %50 : vector<1x128xf32> to vector<112x128xf32>
    %53 = arith.addf %51, %52 : vector<112x128xf32>
    %54 = arith.truncf %53 : vector<112x128xf32> to vector<112x128xbf16>
    %c0_41 = arith.constant 0 : index
    %c0_42 = arith.constant 0 : index
    %55 = vector.load %arg4[%c0_41, %c0_42] : memref<112x128xbf16, #tpu.memory_space<vmem>>, vector<112x128xbf16>
    tpu.vector_store %arg4[%c0_41, %c0_42], %54 {strides = array<i32>} : memref<112x128xbf16, #tpu.memory_space<vmem>>, vector<112x128xbf16>,
    return
  }
}

</mosaic_0001>

<llo_original>
// kernel: gcn_forward.1
$region0: #{gcn_forward.1}
  #allocation0 [shape = 'u32[]', space=smem, size = 0x4, offset = 0x4, fixed_abs, tag = 'smem constant byte address 0x4 - core index']
  #allocation1 [shape = 'u32[144,128]{1,0:T(1,128)}', space=vmem, size = 0x12000, scoped, tag = 'internal scratch']
  %s0 = inlined_call_operand.vmem [shape: bf16[112,112], index: 0, kind: input, shape index: {}]
  %s1 = inlined_call_operand.vmem [shape: bf16[112,128], index: 1, kind: input, shape index: {}]
  %s2 = inlined_call_operand.hbm [shape: bf16[5,128,128], index: 2, kind: input, shape index: {}]
  %s3 = inlined_call_operand.vmem [shape: f32[5,1,128], index: 3, kind: input, shape index: {}]
  %s4 = inlined_call_operand.vmem [shape: bf16[112,128], index: 4, kind: output, shape index: {}]
  %s5 = sld [smem:[#allocation0]]
  $region30: #{gcn_forward.1} parent=0
    _
  %s7 = ssub.s32 1, %s5
  %s8 = scalar_select 0, %s7, %s5
  $region1: #{gcn_forward.1} parent=0
    #allocation2 [shape = 'u8[163840]{0}', space=vmem, size = 0x28000, scoped, tag = 'input window, operand 2, single buffered']
    #allocation3 [shape = 's32[1]{0}', space=sflag, size = 0x4, scoped, tag = 'scoped memory for gcn_forward.1']
    %9 = vsyncpa [#allocation3], 0
    // Predicated region
    $region2: #{gcn_forward.1} parent=1 // pred_check
      _
    $region3: #{gcn_forward.1} parent=1 // pred_check_branch
      %11 = sbr.rel (0) target = $region5
    $region4: #{gcn_forward.1} parent=1 // pred_region
      _
    $region5: #{gcn_forward.1} parent=1 // pred_fallthru
      _
    // Predicated region
    $region6: #{gcn_forward.1} parent=1 // pred_check
      _
    $region7: #{gcn_forward.1} parent=1 // pred_check_branch
      %13 = sbr.rel (0) target = $region9
    $region8: #{gcn_forward.1} parent=1 // pred_region
      _
    $region9: #{gcn_forward.1} parent=1 // pred_fallthru
      _
    // Predicated region
    $region10: #{gcn_forward.1} parent=1 // pred_check
      _
    $region11: #{gcn_forward.1} parent=1 // pred_check_branch
      %15 = sbr.rel (0) target = $region13
    $region12: #{gcn_forward.1} parent=1 // pred_region
      %s17 = ssub.s32 5120, 5120
      %18 = vsyncadd [#allocation3], %s17
      %s19 = sshll.u32 [#allocation2], 4
      %s20 = int_to_ptr.vmem [resolvable:$true] %s19
      %25 = dma.hbm_to_vmem [thread:$0]  %s2, 5120, %s20, [#allocation3], 64, 64, 4
    $region13: #{gcn_forward.1} parent=1 // pred_fallthru
      _
    // Predicated region
    $region14: #{gcn_forward.1} parent=1 // pred_check
      _
    $region15: #{gcn_forward.1} parent=1 // pred_check_branch
      %27 = sbr.rel (0) target = $region17
    $region16: #{gcn_forward.1} parent=1 // pred_region
      _
    $region17: #{gcn_forward.1} parent=1 // pred_fallthru
      _
    // Predicated region
    $region18: #{gcn_forward.1} parent=1 // pred_check
      _
    $region19: #{gcn_forward.1} parent=1 // pred_check_branch
      %29 = sbr.rel (0) target = $region21
    $region20: #{gcn_forward.1} parent=1 // pred_region
      %30 = dma.done [#allocation3], 5120
    $region21: #{gcn_forward.1} parent=1 // pred_fallthru
      _
    %v32 = vld [vmem:[%s1] sm:$0xf]
    %v33 = vld [vmem:[%s1 + $0x4] sm:$0xf]
    %v34 = vld [vmem:[%s1 + $0x8] sm:$0xf]
    %v35 = vld [vmem:[%s1 + $0xc] sm:$0xf]
    %v36 = vld [vmem:[%s1 + $0x10] sm:$0xf]
    %v37 = vld [vmem:[%s1 + $0x14] sm:$0xf]
    %v38 = vld [vmem:[%s1 + $0x18] sm:$0xf]
    %v39 = vld [vmem:[%s1 + $0x1c] sm:$0xf]
    %v40 = vld [vmem:[%s1 + $0x20] sm:$0xf]
    %v41 = vld [vmem:[%s1 + $0x24] sm:$0xf]
    %v42 = vld [vmem:[%s1 + $0x28] sm:$0xf]
    %v43 = vld [vmem:[%s1 + $0x2c] sm:$0xf]
    %v44 = vld [vmem:[%s1 + $0x30] sm:$0xf]
    %v45 = vld [vmem:[%s1 + $0x34] sm:$0xf]
    %v46 = vld [vmem:[#allocation2] sm:$0xf]
    %v47 = vld [vmem:[#allocation2 + $0x4] sm:$0xf]
    %v48 = vld [vmem:[#allocation2 + $0x8] sm:$0xf]
    %v49 = vld [vmem:[#allocation2 + $0xc] sm:$0xf]
    %v50 = vld [vmem:[#allocation2 + $0x10] sm:$0xf]
    %v51 = vld [vmem:[#allocation2 + $0x14] sm:$0xf]
    %v52 = vld [vmem:[#allocation2 + $0x18] sm:$0xf]
    %v53 = vld [vmem:[#allocation2 + $0x1c] sm:$0xf]
    %v54 = vld [vmem:[#allocation2 + $0x20] sm:$0xf]
    %v55 = vld [vmem:[#allocation2 + $0x24] sm:$0xf]
    %v56 = vld [vmem:[#allocation2 + $0x28] sm:$0xf]
    %v57 = vld [vmem:[#allocation2 + $0x2c] sm:$0xf]
    %v58 = vld [vmem:[#allocation2 + $0x30] sm:$0xf]
    %v59 = vld [vmem:[#allocation2 + $0x34] sm:$0xf]
    %v60 = vld [vmem:[#allocation2 + $0x38] sm:$0xf]
    %v61 = vld [vmem:[#allocation2 + $0x3c] sm:$0xf]
    %v62 = vld [vmem:[%s3] sm:$0x1]
    %v64 = vlaneseq
    %v65 = vshrl.u32 %v64, 7
    %v66 = vsub.s32 0, %v65
    %v67 = vrot.slane %v62, %v66
    %v83 = vunpack.c.l.b16 %v32
    %v84 = vunpack.c.l.b16 %v33
    %v85 = vunpack.c.l.b16 %v34
    %v86 = vunpack.c.l.b16 %v35
    %v87 = vunpack.c.l.b16 %v36
    %v88 = vunpack.c.l.b16 %v37
    %v89 = vunpack.c.l.b16 %v38
    %v90 = vunpack.c.l.b16 %v39
    %v91 = vunpack.c.l.b16 %v40
    %v92 = vunpack.c.l.b16 %v41
    %v93 = vunpack.c.l.b16 %v42
    %v94 = vunpack.c.l.b16 %v43
    %v95 = vunpack.c.l.b16 %v44
    %v96 = vunpack.c.l.b16 %v45
    %v97 = vpack.c.b16 %v84, %v83
    %v98 = vpack.c.b16 %v86, %v85
    %v99 = vpack.c.b16 %v88, %v87
    %v100 = vpack.c.b16 %v90, %v89
    %v101 = vpack.c.b16 %v92, %v91
    %v102 = vpack.c.b16 %v94, %v93
    %v103 = vpack.c.b16 %v96, %v95
    %v127 = vunpack.c.l.b16 %v46
    %v128 = vunpack.c.l.b16 %v47
    %v129 = vunpack.c.l.b16 %v48
    %v130 = vunpack.c.l.b16 %v49
    %v131 = vunpack.c.l.b16 %v50
    %v132 = vunpack.c.l.b16 %v51
    %v133 = vunpack.c.l.b16 %v52
    %v134 = vunpack.c.l.b16 %v53
    %v135 = vunpack.c.l.b16 %v54
    %v136 = vunpack.c.l.b16 %v55
    %v137 = vunpack.c.l.b16 %v56
    %v138 = vunpack.c.l.b16 %v57
    %v139 = vunpack.c.l.b16 %v58
    %v140 = vunpack.c.l.b16 %v59
    %v141 = vunpack.c.l.b16 %v60
    %v142 = vunpack.c.l.b16 %v61
    %v143 = vpack.c.b16 %v128, %v127
    %v144 = vpack.c.b16 %v130, %v129
    %v145 = vpack.c.b16 %v132, %v131
    %v146 = vpack.c.b16 %v134, %v133
    %v147 = vpack.c.b16 %v136, %v135
    %v148 = vpack.c.b16 %v138, %v137
    %v149 = vpack.c.b16 %v140, %v139
    %v150 = vpack.c.b16 %v142, %v141
    %159 = vmatprep.subr.bf16.mxu0 0
    %160 = vmatpush1.bf16.msra.mxu0 %v143
    %161 = vmatprep.subr.bf16.mxu0 0
    %162 = vmatpush1.bf16.msra.mxu0 %v144
    %163 = vmatprep.subr.bf16.mxu0 0
    %164 = vmatpush1.bf16.msra.mxu0 %v145
    %165 = vmatprep.subr.bf16.mxu0 0
    %166 = vmatpush1.bf16.msra.mxu0 %v146
    %167 = vmatprep.subr.bf16.mxu0 0
    %168 = vmatpush1.bf16.msra.mxu0 %v147
    %169 = vmatprep.subr.bf16.mxu0 0
    %170 = vmatpush1.bf16.msra.mxu0 %v148
    %171 = vmatprep.subr.bf16.mxu0 0
    %172 = vmatpush1.bf16.msra.mxu0 %v149
    %173 = vmatprep.subr.bf16.mxu0 0
    %174 = vmatpush1.bf16.msra.mxu0 %v150
    %175 = vmatprep.subr.bf16.mxu0 0
    %176 = vmatpush1.bf16.msra.mxu0 0
    %177 = vmatprep.subr.bf16.mxu0 0
    %178 = vmatpush1.bf16.msra.mxu0 0
    %179 = vmatprep.subr.bf16.mxu0 0
    %180 = vmatpush1.bf16.msra.mxu0 0
    %181 = vmatprep.subr.bf16.mxu0 0
    %182 = vmatpush1.bf16.msra.mxu0 0
    %183 = vmatprep.subr.bf16.mxu0 0
    %184 = vmatpush1.bf16.msra.mxu0 0
    %185 = vmatprep.subr.bf16.mxu0 0
    %186 = vmatpush1.bf16.msra.mxu0 0
    %187 = vmatprep.subr.bf16.mxu0 0
    %188 = vmatpush1.bf16.msra.mxu0 0
    %189 = vmatprep.subr.bf16.mxu0 0
    %190 = vmatpush1.bf16.msra.mxu0 0
    %191 = vmatprep.mubr.bf16.mxu0 0
    %192 = vmatmul.mubr.bf16.gmra.mrb[0].mxu0 %v97
    %v193 = vpop.f32.mrb[0].mxu0
    %v194 = vadd.f32 %v67, %v193
    %v195 = vpop.f32.mrb[0].mxu0
    %v196 = vpop.f32.mrb[0].mxu0
    %v197 = vadd.f32 %v67, %v196
    %v198 = vpop.f32.mrb[0].mxu0
    %199 = vmatprep.mubr.bf16.mxu0 0
    %200 = vmatmul.mubr.bf16.gmra.mrb[0].mxu0 %v98
    %v201 = vpop.f32.mrb[0].mxu0
    %v202 = vadd.f32 %v67, %v201
    %v203 = vpop.f32.mrb[0].mxu0
    %v204 = vpop.f32.mrb[0].mxu0
    %v205 = vadd.f32 %v67, %v204
    %v206 = vpop.f32.mrb[0].mxu0
    %207 = vmatprep.mubr.bf16.mxu0 0
    %208 = vmatmul.mubr.bf16.gmra.mrb[0].mxu0 %v99
    %v209 = vpop.f32.mrb[0].mxu0
    %v210 = vadd.f32 %v67, %v209
    %v211 = vpop.f32.mrb[0].mxu0
    %v212 = vpop.f32.mrb[0].mxu0
    %v213 = vadd.f32 %v67, %v212
    %v214 = vpop.f32.mrb[0].mxu0
    %215 = vmatprep.mubr.bf16.mxu0 0
    %216 = vmatmul.mubr.bf16.gmra.mrb[0].mxu0 %v100
    %v217 = vpop.f32.mrb[0].mxu0
    %v218 = vadd.f32 %v67, %v217
    %v219 = vpop.f32.mrb[0].mxu0
    %v220 = vpop.f32.mrb[0].mxu0
    %v221 = vadd.f32 %v67, %v220
    %v222 = vpop.f32.mrb[0].mxu0
    %223 = vmatprep.mubr.bf16.mxu0 0
    %224 = vmatmul.mubr.bf16.gmra.mrb[0].mxu0 %v101
    %v225 = vpop.f32.mrb[0].mxu0
    %v226 = vadd.f32 %v67, %v225
    %v227 = vpop.f32.mrb[0].mxu0
    %v228 = vpop.f32.mrb[0].mxu0
    %v229 = vadd.f32 %v67, %v228
    %v230 = vpop.f32.mrb[0].mxu0
    %231 = vmatprep.mubr.bf16.mxu0 0
    %232 = vmatmul.mubr.bf16.gmra.mrb[0].mxu0 %v102
    %v233 = vpop.f32.mrb[0].mxu0
    %v234 = vadd.f32 %v67, %v233
    %v235 = vpop.f32.mrb[0].mxu0
    %v236 = vpop.f32.mrb[0].mxu0
    %v237 = vadd.f32 %v67, %v236
    %v238 = vpop.f32.mrb[0].mxu0
    %239 = vmatprep.mubr.bf16.mxu0 0
    %240 = vmatmul.mubr.bf16.gmra.mrb[0].mxu0 %v103
    %v241 = vpop.f32.mrb[0].mxu0
    %v242 = vadd.f32 %v67, %v241
    %v243 = vpop.f32.mrb[0].mxu0
    %v244 = vpop.f32.mrb[0].mxu0
    %v245 = vadd.f32 %v67, %v244
    %v246 = vpop.f32.mrb[0].mxu0
    %247 = vdwg.mxu0
    %v248 = vmax.f32 %v194, 0.0
    %v249 = vmax.f32 %v197, 0.0
    %v250 = vmax.f32 %v202, 0.0
    %v251 = vmax.f32 %v205, 0.0
    %v252 = vmax.f32 %v210, 0.0
    %v253 = vmax.f32 %v213, 0.0
    %v254 = vmax.f32 %v218, 0.0
    %v255 = vmax.f32 %v221, 0.0
    %v256 = vmax.f32 %v226, 0.0
    %v257 = vmax.f32 %v229, 0.0
    %v258 = vmax.f32 %v234, 0.0
    %v259 = vmax.f32 %v237, 0.0
    %v260 = vmax.f32 %v242, 0.0
    %v261 = vmax.f32 %v245, 0.0
    %v262 = vpack.c.bf16 %v249, %v248
    %v263 = vpack.c.bf16 %v251, %v250
    %v264 = vpack.c.bf16 %v253, %v252
    %v265 = vpack.c.bf16 %v255, %v254
    %v266 = vpack.c.bf16 %v257, %v256
    %v267 = vpack.c.bf16 %v259, %v258
    %v268 = vpack.c.bf16 %v261, %v260
    %s269 = scalar_lea.vmem [#allocation2], 64
    %v270 = vld [vmem:[%s269] sm:$0xf]
    %v271 = vld [vmem:[%s269 + $0x4] sm:$0xf]
    %v272 = vld [vmem:[%s269 + $0x8] sm:$0xf]
    %v273 = vld [vmem:[%s269 + $0xc] sm:$0xf]
    %v274 = vld [vmem:[%s269 + $0x10] sm:$0xf]
    %v275 = vld [vmem:[%s269 + $0x14] sm:$0xf]
    %v276 = vld [vmem:[%s269 + $0x18] sm:$0xf]
    %v277 = vld [vmem:[%s269 + $0x1c] sm:$0xf]
    %v278 = vld [vmem:[%s269 + $0x20] sm:$0xf]
    %v279 = vld [vmem:[%s269 + $0x24] sm:$0xf]
    %v280 = vld [vmem:[%s269 + $0x28] sm:$0xf]
    %v281 = vld [vmem:[%s269 + $0x2c] sm:$0xf]
    %v282 = vld [vmem:[%s269 + $0x30] sm:$0xf]
    %v283 = vld [vmem:[%s269 + $0x34] sm:$0xf]
    %v284 = vld [vmem:[%s269 + $0x38] sm:$0xf]
    %v285 = vld [vmem:[%s269 + $0x3c] sm:$0xf]
    %s286 = scalar_lea.vmem %s3, 1
    %v287 = vld [vmem:[%s286] sm:$0x1]
    %v304 = vunpack.c.l.b16 %v270
    %v305 = vunpack.c.l.b16 %v271
    %v306 = vunpack.c.l.b16 %v272
    %v307 = vunpack.c.l.b16 %v273
    %v308 = vunpack.c.l.b16 %v274
    %v309 = vunpack.c.l.b16 %v275
    %v310 = vunpack.c.l.b16 %v276
    %v311 = vunpack.c.l.b16 %v277
    %v312 = vunpack.c.l.b16 %v278
    %v313 = vunpack.c.l.b16 %v279
    %v314 = vunpack.c.l.b16 %v280
    %v315 = vunpack.c.l.b16 %v281
    %v316 = vunpack.c.l.b16 %v282
    %v317 = vunpack.c.l.b16 %v283
    %v318 = vunpack.c.l.b16 %v284
    %v319 = vunpack.c.l.b16 %v285
    %v320 = vpack.c.b16 %v305, %v304
    %v321 = vpack.c.b16 %v307, %v306
    %v322 = vpack.c.b16 %v309, %v308
    %v323 = vpack.c.b16 %v311, %v310
    %v324 = vpack.c.b16 %v313, %v312
    %v325 = vpack.c.b16 %v315, %v314
    %v326 = vpack.c.b16 %v317, %v316
    %v327 = vpack.c.b16 %v319, %v318
    %336 = vmatprep.subr.bf16.mxu0 0
    %337 = vmatpush1.bf16.msra.mxu0 %v320
    %338 = vmatprep.subr.bf16.mxu0 0
    %339 = vmatpush1.bf16.msra.mxu0 %v321
    %340 = vmatprep.subr.bf16.mxu0 0
    %341 = vmatpush1.bf16.msra.mxu0 %v322
    %342 = vmatprep.subr.bf16.mxu0 0
    %343 = vmatpush1.bf16.msra.mxu0 %v323
    %344 = vmatprep.subr.bf16.mxu0 0
    %345 = vmatpush1.bf16.msra.mxu0 %v324
    %346 = vmatprep.subr.bf16.mxu0 0
    %347 = vmatpush1.bf16.msra.mxu0 %v325
    %348 = vmatprep.subr.bf16.mxu0 0
    %349 = vmatpush1.bf16.msra.mxu0 %v326
    %350 = vmatprep.subr.bf16.mxu0 0
    %351 = vmatpush1.bf16.msra.mxu0 %v327
    %352 = vmatprep.subr.bf16.mxu0 0
    %353 = vmatpush1.bf16.msra.mxu0 0
    %354 = vmatprep.subr.bf16.mxu0 0
    %355 = vmatpush1.bf16.msra.mxu0 0
    %356 = vmatprep.subr.bf16.mxu0 0
    %357 = vmatpush1.bf16.msra.mxu0 0
    %358 = vmatprep.subr.bf16.mxu0 0
    %359 = vmatpush1.bf16.msra.mxu0 0
    %360 = vmatprep.subr.bf16.mxu0 0
    %361 = vmatpush1.bf16.msra.mxu0 0
    %362 = vmatprep.subr.bf16.mxu0 0
    %363 = vmatpush1.bf16.msra.mxu0 0
    %364 = vmatprep.subr.bf16.mxu0 0
    %365 = vmatpush1.bf16.msra.mxu0 0
    %366 = vmatprep.subr.bf16.mxu0 0
    %367 = vmatpush1.bf16.msra.mxu0 0
    %368 = vmatprep.mubr.bf16.mxu0 0
    %369 = vmatmul.mubr.bf16.gmra.mrb[0].mxu0 %v262
    %v370 = vpop.f32.mrb[0].mxu0
    %v371 = vadd.f32 0.0, %v370
    %v372 = vpop.f32.mrb[0].mxu0
    %v373 = vpop.f32.mrb[0].mxu0
    %v374 = vadd.f32 0.0, %v373
    %v375 = vpop.f32.mrb[0].mxu0
    %376 = vmatprep.mubr.bf16.mxu0 0
    %377 = vmatmul.mubr.bf16.gmra.mrb[0].mxu0 %v263
    %v378 = vpop.f32.mrb[0].mxu0
    %v379 = vadd.f32 0.0, %v378
    %v380 = vpop.f32.mrb[0].mxu0
    %v381 = vpop.f32.mrb[0].mxu0
    %v382 = vadd.f32 0.0, %v381
    %v383 = vpop.f32.mrb[0].mxu0
    %384 = vmatprep.mubr.bf16.mxu0 0
    %385 = vmatmul.mubr.bf16.gmra.mrb[0].mxu0 %v264
    %v386 = vpop.f32.mrb[0].mxu0
    %v387 = vadd.f32 0.0, %v386
    %v388 = vpop.f32.mrb[0].mxu0
    %v389 = vpop.f32.mrb[0].mxu0
    %v390 = vadd.f32 0.0, %v389
    %v391 = vpop.f32.mrb[0].mxu0
    %392 = vmatprep.mubr.bf16.mxu0 0
    %393 = vmatmul.mubr.bf16.gmra.mrb[0].mxu0 %v265
    %v394 = vpop.f32.mrb[0].mxu0
    %v395 = vadd.f32 0.0, %v394
    %v396 = vpop.f32.mrb[0].mxu0
    %v397 = vpop.f32.mrb[0].mxu0
    %v398 = vadd.f32 0.0, %v397
    %v399 = vpop.f32.mrb[0].mxu0
    %400 = vmatprep.mubr.bf16.mxu0 0
    %401 = vmatmul.mubr.bf16.gmra.mrb[0].mxu0 %v266
    %v402 = vpop.f32.mrb[0].mxu0
    %v403 = vadd.f32 0.0, %v402
    %v404 = vpop.f32.mrb[0].mxu0
    %v405 = vpop.f32.mrb[0].mxu0
    %v406 = vadd.f32 0.0, %v405
    %v407 = vpop.f32.mrb[0].mxu0
    %408 = vmatprep.mubr.bf16.mxu0 0
    %409 = vmatmul.mubr.bf16.gmra.mrb[0].mxu0 %v267
    %v410 = vpop.f32.mrb[0].mxu0
    %v411 = vadd.f32 0.0, %v410
    %v412 = vpop.f32.mrb[0].mxu0
    %v413 = vpop.f32.mrb[0].mxu0
    %v414 = vadd.f32 0.0, %v413
    %v415 = vpop.f32.mrb[0].mxu0
    %416 = vmatprep.mubr.bf16.mxu0 0
    %417 = vmatmul.mubr.bf16.gmra.mrb[0].mxu0 %v268
    %v418 = vpop.f32.mrb[0].mxu0
    %v419 = vadd.f32 0.0, %v418
    %v420 = vpop.f32.mrb[0].mxu0
    %v421 = vpop.f32.mrb[0].mxu0
    %v422 = vadd.f32 0.0, %v421
    %v423 = vpop.f32.mrb[0].mxu0
    %424 = vdwg.mxu0
    %v425 = vld [vmem:[%s0] sm:$0xf]
    %v426 = vld [vmem:[%s0 + $0x4] sm:$0xf]
    %v427 = vld [vmem:[%s0 + $0x8] sm:$0xf]
    %v428 = vld [vmem:[%s0 + $0xc] sm:$0xf]
    %v429 = vld [vmem:[%s0 + $0x10] sm:$0xf]
    %v430 = vld [vmem:[%s0 + $0x14] sm:$0xf]
    %v431 = vld [vmem:[%s0 + $0x18] sm:$0xf]
    %v432 = vld [vmem:[%s0 + $0x1c] sm:$0xf]
    %v433 = vld [vmem:[%s0 + $0x20] sm:$0xf]
    %v434 = vld [vmem:[%s0 + $0x24] sm:$0xf]
    %v435 = vld [vmem:[%s0 + $0x28] sm:$0xf]
    %v436 = vld [vmem:[%s0 + $0x2c] sm:$0xf]
    %v437 = vld [vmem:[%s0 + $0x30] sm:$0xf]
    %v438 = vld [vmem:[%s0 + $0x34] sm:$0xf]
    %v439 = vpack.c.bf16 %v374, %v371
    %v440 = vpack.c.bf16 %v382, %v379
    %v441 = vpack.c.bf16 %v390, %v387
    %v442 = vpack.c.bf16 %v398, %v395
    %v443 = vpack.c.bf16 %v406, %v403
    %v444 = vpack.c.bf16 %v414, %v411
    %v445 = vpack.c.bf16 %v422, %v419
    %v447 = vlaneseq
    %v448 = vshrl.u32 %v447, 7
    %v449 = vsub.s32 0, %v448
    %v450 = vrot.slane %v287, %v449
    %v466 = vunpack.c.l.b16 %v425
    %v467 = vunpack.c.l.b16 %v426
    %v468 = vunpack.c.l.b16 %v427
    %v469 = vunpack.c.l.b16 %v428
    %v470 = vunpack.c.l.b16 %v429
    %v471 = vunpack.c.l.b16 %v430
    %v472 = vunpack.c.l.b16 %v431
    %v473 = vunpack.c.l.b16 %v432
    %v474 = vunpack.c.l.b16 %v433
    %v475 = vunpack.c.l.b16 %v434
    %v476 = vunpack.c.l.b16 %v435
    %v477 = vunpack.c.l.b16 %v436
    %v478 = vunpack.c.l.b16 %v437
    %v479 = vunpack.c.l.b16 %v438
    %v480 = vpack.c.b16 %v467, %v466
    %v481 = vpack.c.b16 %v469, %v468
    %v482 = vpack.c.b16 %v471, %v470
    %v483 = vpack.c.b16 %v473, %v472
    %v484 = vpack.c.b16 %v475, %v474
    %v485 = vpack.c.b16 %v477, %v476
    %v486 = vpack.c.b16 %v479, %v478
    %vm487 = vcmask 916480
    %v489 = vsel %vm487, %v480, 0
    %v492 = vsel %vm487, %v481, 0
    %v495 = vsel %vm487, %v482, 0
    %v498 = vsel %vm487, %v483, 0
    %v501 = vsel %vm487, %v484, 0
    %v504 = vsel %vm487, %v485, 0
    %v507 = vsel %vm487, %v486, 0
    %509 = vmatprep.subr.bf16.mxu0 0
    %510 = vmatpush1.bf16.msra.mxu0 %v439
    %511 = vmatprep.subr.bf16.mxu0 0
    %512 = vmatpush1.bf16.msra.mxu0 %v440
    %513 = vmatprep.subr.bf16.mxu0 0
    %514 = vmatpush1.bf16.msra.mxu0 %v441
    %515 = vmatprep.subr.bf16.mxu0 0
    %516 = vmatpush1.bf16.msra.mxu0 %v442
    %517 = vmatprep.subr.bf16.mxu0 0
    %518 = vmatpush1.bf16.msra.mxu0 %v443
    %519 = vmatprep.subr.bf16.mxu0 0
    %520 = vmatpush1.bf16.msra.mxu0 %v444
    %521 = vmatprep.subr.bf16.mxu0 0
    %522 = vmatpush1.bf16.msra.mxu0 %v445
    %523 = vmatprep.subr.bf16.mxu0 0
    %524 = vmatpush1.bf16.msra.mxu0 0
    %525 = vmatprep.subr.bf16.mxu0 0
    %526 = vmatpush1.bf16.msra.mxu0 0
    %527 = vmatprep.subr.bf16.mxu0 0
    %528 = vmatpush1.bf16.msra.mxu0 0
    %529 = vmatprep.subr.bf16.mxu0 0
    %530 = vmatpush1.bf16.msra.mxu0 0
    %531 = vmatprep.subr.bf16.mxu0 0
    %532 = vmatpush1.bf16.msra.mxu0 0
    %533 = vmatprep.subr.bf16.mxu0 0
    %534 = vmatpush1.bf16.msra.mxu0 0
    %535 = vmatprep.subr.bf16.mxu0 0
    %536 = vmatpush1.bf16.msra.mxu0 0
    %537 = vmatprep.subr.bf16.mxu0 0
    %538 = vmatpush1.bf16.msra.mxu0 0
    %539 = vmatprep.subr.bf16.mxu0 0
    %540 = vmatpush1.bf16.msra.mxu0 0
    %541 = vmatprep.mubr.bf16.mxu0 0
    %542 = vmatmul.mubr.bf16.gmra.mrb[0].mxu0 %v489
    %v543 = vpop.f32.mrb[0].mxu0
    %v544 = vadd.f32 %v450, %v543
    %v545 = vpop.f32.mrb[0].mxu0
    %v546 = vpop.f32.mrb[0].mxu0
    %v547 = vadd.f32 %v450, %v546
    %v548 = vpop.f32.mrb[0].mxu0
    %549 = vmatprep.mubr.bf16.mxu0 0
    %550 = vmatmul.mubr.bf16.gmra.mrb[0].mxu0 %v492
    %v551 = vpop.f32.mrb[0].mxu0
    %v552 = vadd.f32 %v450, %v551
    %v553 = vpop.f32.mrb[0].mxu0
    %v554 = vpop.f32.mrb[0].mxu0
    %v555 = vadd.f32 %v450, %v554
    %v556 = vpop.f32.mrb[0].mxu0
    %557 = vmatprep.mubr.bf16.mxu0 0
    %558 = vmatmul.mubr.bf16.gmra.mrb[0].mxu0 %v495
    %v559 = vpop.f32.mrb[0].mxu0
    %v560 = vadd.f32 %v450, %v559
    %v561 = vpop.f32.mrb[0].mxu0
    %v562 = vpop.f32.mrb[0].mxu0
    %v563 = vadd.f32 %v450, %v562
    %v564 = vpop.f32.mrb[0].mxu0
    %565 = vmatprep.mubr.bf16.mxu0 0
    %566 = vmatmul.mubr.bf16.gmra.mrb[0].mxu0 %v498
    %v567 = vpop.f32.mrb[0].mxu0
    %v568 = vadd.f32 %v450, %v567
    %v569 = vpop.f32.mrb[0].mxu0
    %v570 = vpop.f32.mrb[0].mxu0
    %v571 = vadd.f32 %v450, %v570
    %v572 = vpop.f32.mrb[0].mxu0
    %573 = vmatprep.mubr.bf16.mxu0 0
    %574 = vmatmul.mubr.bf16.gmra.mrb[0].mxu0 %v501
    %v575 = vpop.f32.mrb[0].mxu0
    %v576 = vadd.f32 %v450, %v575
    %v577 = vpop.f32.mrb[0].mxu0
    %v578 = vpop.f32.mrb[0].mxu0
    %v579 = vadd.f32 %v450, %v578
    %v580 = vpop.f32.mrb[0].mxu0
    %581 = vmatprep.mubr.bf16.mxu0 0
    %582 = vmatmul.mubr.bf16.gmra.mrb[0].mxu0 %v504
    %v583 = vpop.f32.mrb[0].mxu0
    %v584 = vadd.f32 %v450, %v583
    %v585 = vpop.f32.mrb[0].mxu0
    %v586 = vpop.f32.mrb[0].mxu0
    %v587 = vadd.f32 %v450, %v586
    %v588 = vpop.f32.mrb[0].mxu0
    %589 = vmatprep.mubr.bf16.mxu0 0
    %590 = vmatmul.mubr.bf16.gmra.mrb[0].mxu0 %v507
    %v591 = vpop.f32.mrb[0].mxu0
    %v592 = vadd.f32 %v450, %v591
    %v593 = vpop.f32.mrb[0].mxu0
    %v594 = vpop.f32.mrb[0].mxu0
    %v595 = vadd.f32 %v450, %v594
    %v596 = vpop.f32.mrb[0].mxu0
    %597 = vdwg.mxu0
    %v598 = vmax.f32 %v544, 0.0
    %v599 = vmax.f32 %v547, 0.0
    %v600 = vmax.f32 %v552, 0.0
    %v601 = vmax.f32 %v555, 0.0
    %v602 = vmax.f32 %v560, 0.0
    %v603 = vmax.f32 %v563, 0.0
    %v604 = vmax.f32 %v568, 0.0
    %v605 = vmax.f32 %v571, 0.0
    %v606 = vmax.f32 %v576, 0.0
    %v607 = vmax.f32 %v579, 0.0
    %v608 = vmax.f32 %v584, 0.0
    %v609 = vmax.f32 %v587, 0.0
    %v610 = vmax.f32 %v592, 0.0
    %v611 = vmax.f32 %v595, 0.0
    %v612 = vpack.c.bf16 %v599, %v598
    %v613 = vpack.c.bf16 %v601, %v600
    %v614 = vpack.c.bf16 %v603, %v602
    %v615 = vpack.c.bf16 %v605, %v604
    %v616 = vpack.c.bf16 %v607, %v606
    %v617 = vpack.c.bf16 %v609, %v608
    %v618 = vpack.c.bf16 %v611, %v610
    %s619 = scalar_lea.vmem [#allocation2], 128
    %v620 = vld [vmem:[%s619] sm:$0xf]
    %v621 = vld [vmem:[%s619 + $0x4] sm:$0xf]
    %v622 = vld [vmem:[%s619 + $0x8] sm:$0xf]
    %v623 = vld [vmem:[%s619 + $0xc] sm:$0xf]
    %v624 = vld [vmem:[%s619 + $0x10] sm:$0xf]
    %v625 = vld [vmem:[%s619 + $0x14] sm:$0xf]
    %v626 = vld [vmem:[%s619 + $0x18] sm:$0xf]
    %v627 = vld [vmem:[%s619 + $0x1c] sm:$0xf]
    %v628 = vld [vmem:[%s619 + $0x20] sm:$0xf]
    %v629 = vld [vmem:[%s619 + $0x24] sm:$0xf]
    %v630 = vld [vmem:[%s619 + $0x28] sm:$0xf]
    %v631 = vld [vmem:[%s619 + $0x2c] sm:$0xf]
    %v632 = vld [vmem:[%s619 + $0x30] sm:$0xf]
    %v633 = vld [vmem:[%s619 + $0x34] sm:$0xf]
    %v634 = vld [vmem:[%s619 + $0x38] sm:$0xf]
    %v635 = vld [vmem:[%s619 + $0x3c] sm:$0xf]
    %s636 = scalar_lea.vmem %s3, 2
    %v637 = vld [vmem:[%s636] sm:$0x1]
    %v654 = vunpack.c.l.b16 %v620
    %v655 = vunpack.c.l.b16 %v621
    %v656 = vunpack.c.l.b16 %v622
    %v657 = vunpack.c.l.b16 %v623
    %v658 = vunpack.c.l.b16 %v624
    %v659 = vunpack.c.l.b16 %v625
    %v660 = vunpack.c.l.b16 %v626
    %v661 = vunpack.c.l.b16 %v627
    %v662 = vunpack.c.l.b16 %v628
    %v663 = vunpack.c.l.b16 %v629
    %v664 = vunpack.c.l.b16 %v630
    %v665 = vunpack.c.l.b16 %v631
    %v666 = vunpack.c.l.b16 %v632
    %v667 = vunpack.c.l.b16 %v633
    %v668 = vunpack.c.l.b16 %v634
    %v669 = vunpack.c.l.b16 %v635
    %v670 = vpack.c.b16 %v655, %v654
    %v671 = vpack.c.b16 %v657, %v656
    %v672 = vpack.c.b16 %v659, %v658
    %v673 = vpack.c.b16 %v661, %v660
    %v674 = vpack.c.b16 %v663, %v662
    %v675 = vpack.c.b16 %v665, %v664
    %v676 = vpack.c.b16 %v667, %v666
    %v677 = vpack.c.b16 %v669, %v668
    %686 = vmatprep.subr.bf16.mxu0 0
    %687 = vmatpush1.bf16.msra.mxu0 %v670
    %688 = vmatprep.subr.bf16.mxu0 0
    %689 = vmatpush1.bf16.msra.mxu0 %v671
    %690 = vmatprep.subr.bf16.mxu0 0
    %691 = vmatpush1.bf16.msra.mxu0 %v672
    %692 = vmatprep.subr.bf16.mxu0 0
    %693 = vmatpush1.bf16.msra.mxu0 %v673
    %694 = vmatprep.subr.bf16.mxu0 0
    %695 = vmatpush1.bf16.msra.mxu0 %v674
    %696 = vmatprep.subr.bf16.mxu0 0
    %697 = vmatpush1.bf16.msra.mxu0 %v675
    %698 = vmatprep.subr.bf16.mxu0 0
    %699 = vmatpush1.bf16.msra.mxu0 %v676
    %700 = vmatprep.subr.bf16.mxu0 0
    %701 = vmatpush1.bf16.msra.mxu0 %v677
    %702 = vmatprep.subr.bf16.mxu0 0
    %703 = vmatpush1.bf16.msra.mxu0 0
    %704 = vmatprep.subr.bf16.mxu0 0
    %705 = vmatpush1.bf16.msra.mxu0 0
    %706 = vmatprep.subr.bf16.mxu0 0
    %707 = vmatpush1.bf16.msra.mxu0 0
    %708 = vmatprep.subr.bf16.mxu0 0
    %709 = vmatpush1.bf16.msra.mxu0 0
    %710 = vmatprep.subr.bf16.mxu0 0
    %711 = vmatpush1.bf16.msra.mxu0 0
    %712 = vmatprep.subr.bf16.mxu0 0
    %713 = vmatpush1.bf16.msra.mxu0 0
    %714 = vmatprep.subr.bf16.mxu0 0
    %715 = vmatpush1.bf16.msra.mxu0 0
    %716 = vmatprep.subr.bf16.mxu0 0
    %717 = vmatpush1.bf16.msra.mxu0 0
    %718 = vmatprep.mubr.bf16.mxu0 0
    %719 = vmatmul.mubr.bf16.gmra.mrb[0].mxu0 %v612
    %v720 = vpop.f32.mrb[0].mxu0
    %v721 = vadd.f32 0.0, %v720
    %v722 = vpop.f32.mrb[0].mxu0
    %v723 = vpop.f32.mrb[0].mxu0
    %v724 = vadd.f32 0.0, %v723
    %v725 = vpop.f32.mrb[0].mxu0
    %726 = vmatprep.mubr.bf16.mxu0 0
    %727 = vmatmul.mubr.bf16.gmra.mrb[0].mxu0 %v613
    %v728 = vpop.f32.mrb[0].mxu0
    %v729 = vadd.f32 0.0, %v728
    %v730 = vpop.f32.mrb[0].mxu0
    %v731 = vpop.f32.mrb[0].mxu0
    %v732 = vadd.f32 0.0, %v731
    %v733 = vpop.f32.mrb[0].mxu0
    %734 = vmatprep.mubr.bf16.mxu0 0
    %735 = vmatmul.mubr.bf16.gmra.mrb[0].mxu0 %v614
    %v736 = vpop.f32.mrb[0].mxu0
    %v737 = vadd.f32 0.0, %v736
    %v738 = vpop.f32.mrb[0].mxu0
    %v739 = vpop.f32.mrb[0].mxu0
    %v740 = vadd.f32 0.0, %v739
    %v741 = vpop.f32.mrb[0].mxu0
    %742 = vmatprep.mubr.bf16.mxu0 0
    %743 = vmatmul.mubr.bf16.gmra.mrb[0].mxu0 %v615
    %v744 = vpop.f32.mrb[0].mxu0
    %v745 = vadd.f32 0.0, %v744
    %v746 = vpop.f32.mrb[0].mxu0
    %v747 = vpop.f32.mrb[0].mxu0
    %v748 = vadd.f32 0.0, %v747
    %v749 = vpop.f32.mrb[0].mxu0
    %750 = vmatprep.mubr.bf16.mxu0 0
    %751 = vmatmul.mubr.bf16.gmra.mrb[0].mxu0 %v616
    %v752 = vpop.f32.mrb[0].mxu0
    %v753 = vadd.f32 0.0, %v752
    %v754 = vpop.f32.mrb[0].mxu0
    %v755 = vpop.f32.mrb[0].mxu0
    %v756 = vadd.f32 0.0, %v755
    %v757 = vpop.f32.mrb[0].mxu0
    %758 = vmatprep.mubr.bf16.mxu0 0
    %759 = vmatmul.mubr.bf16.gmra.mrb[0].mxu0 %v617
    %v760 = vpop.f32.mrb[0].mxu0
    %v761 = vadd.f32 0.0, %v760
    %v762 = vpop.f32.mrb[0].mxu0
    %v763 = vpop.f32.mrb[0].mxu0
    %v764 = vadd.f32 0.0, %v763
    %v765 = vpop.f32.mrb[0].mxu0
    %766 = vmatprep.mubr.bf16.mxu0 0
    %767 = vmatmul.mubr.bf16.gmra.mrb[0].mxu0 %v618
    %v768 = vpop.f32.mrb[0].mxu0
    %v769 = vadd.f32 0.0, %v768
    %v770 = vpop.f32.mrb[0].mxu0
    %v771 = vpop.f32.mrb[0].mxu0
    %v772 = vadd.f32 0.0, %v771
    %v773 = vpop.f32.mrb[0].mxu0
    %774 = vdwg.mxu0
    %v775 = vpack.c.bf16 %v724, %v721
    %v776 = vpack.c.bf16 %v732, %v729
    %v777 = vpack.c.bf16 %v740, %v737
    %v778 = vpack.c.bf16 %v748, %v745
    %v779 = vpack.c.bf16 %v756, %v753
    %v780 = vpack.c.bf16 %v764, %v761
    %v781 = vpack.c.bf16 %v772, %v769
    %v783 = vlaneseq
    %v784 = vshrl.u32 %v783, 7
    %v785 = vsub.s32 0, %v784
    %v786 = vrot.slane %v637, %v785
    %788 = vmatprep.subr.bf16.mxu0 0
    %789 = vmatpush1.bf16.msra.mxu0 %v775
    %790 = vmatprep.subr.bf16.mxu0 0
    %791 = vmatpush1.bf16.msra.mxu0 %v776
    %792 = vmatprep.subr.bf16.mxu0 0
    %793 = vmatpush1.bf16.msra.mxu0 %v777
    %794 = vmatprep.subr.bf16.mxu0 0
    %795 = vmatpush1.bf16.msra.mxu0 %v778
    %796 = vmatprep.subr.bf16.mxu0 0
    %797 = vmatpush1.bf16.msra.mxu0 %v779
    %798 = vmatprep.subr.bf16.mxu0 0
    %799 = vmatpush1.bf16.msra.mxu0 %v780
    %800 = vmatprep.subr.bf16.mxu0 0
    %801 = vmatpush1.bf16.msra.mxu0 %v781
    %802 = vmatprep.subr.bf16.mxu0 0
    %803 = vmatpush1.bf16.msra.mxu0 0
    %804 = vmatprep.subr.bf16.mxu0 0
    %805 = vmatpush1.bf16.msra.mxu0 0
    %806 = vmatprep.subr.bf16.mxu0 0
    %807 = vmatpush1.bf16.msra.mxu0 0
    %808 = vmatprep.subr.bf16.mxu0 0
    %809 = vmatpush1.bf16.msra.mxu0 0
    %810 = vmatprep.subr.bf16.mxu0 0
    %811 = vmatpush1.bf16.msra.mxu0 0
    %812 = vmatprep.subr.bf16.mxu0 0
    %813 = vmatpush1.bf16.msra.mxu0 0
    %814 = vmatprep.subr.bf16.mxu0 0
    %815 = vmatpush1.bf16.msra.mxu0 0
    %816 = vmatprep.subr.bf16.mxu0 0
    %817 = vmatpush1.bf16.msra.mxu0 0
    %818 = vmatprep.subr.bf16.mxu0 0
    %819 = vmatpush1.bf16.msra.mxu0 0
    %820 = vmatprep.mubr.bf16.mxu0 0
    %821 = vmatmul.mubr.bf16.gmra.mrb[0].mxu0 %v489
    %v822 = vpop.f32.mrb[0].mxu0
    %v823 = vadd.f32 %v786, %v822
    %v824 = vpop.f32.mrb[0].mxu0
    %v825 = vpop.f32.mrb[0].mxu0
    %v826 = vadd.f32 %v786, %v825
    %v827 = vpop.f32.mrb[0].mxu0
    %828 = vmatprep.mubr.bf16.mxu0 0
    %829 = vmatmul.mubr.bf16.gmra.mrb[0].mxu0 %v492
    %v830 = vpop.f32.mrb[0].mxu0
    %v831 = vadd.f32 %v786, %v830
    %v832 = vpop.f32.mrb[0].mxu0
    %v833 = vpop.f32.mrb[0].mxu0
    %v834 = vadd.f32 %v786, %v833
    %v835 = vpop.f32.mrb[0].mxu0
    %836 = vmatprep.mubr.bf16.mxu0 0
    %837 = vmatmul.mubr.bf16.gmra.mrb[0].mxu0 %v495
    %v838 = vpop.f32.mrb[0].mxu0
    %v839 = vadd.f32 %v786, %v838
    %v840 = vpop.f32.mrb[0].mxu0
    %v841 = vpop.f32.mrb[0].mxu0
    %v842 = vadd.f32 %v786, %v841
    %v843 = vpop.f32.mrb[0].mxu0
    %844 = vmatprep.mubr.bf16.mxu0 0
    %845 = vmatmul.mubr.bf16.gmra.mrb[0].mxu0 %v498
    %v846 = vpop.f32.mrb[0].mxu0
    %v847 = vadd.f32 %v786, %v846
    %v848 = vpop.f32.mrb[0].mxu0
    %v849 = vpop.f32.mrb[0].mxu0
    %v850 = vadd.f32 %v786, %v849
    %v851 = vpop.f32.mrb[0].mxu0
    %852 = vmatprep.mubr.bf16.mxu0 0
    %853 = vmatmul.mubr.bf16.gmra.mrb[0].mxu0 %v501
    %v854 = vpop.f32.mrb[0].mxu0
    %v855 = vadd.f32 %v786, %v854
    %v856 = vpop.f32.mrb[0].mxu0
    %v857 = vpop.f32.mrb[0].mxu0
    %v858 = vadd.f32 %v786, %v857
    %v859 = vpop.f32.mrb[0].mxu0
    %860 = vmatprep.mubr.bf16.mxu0 0
    %861 = vmatmul.mubr.bf16.gmra.mrb[0].mxu0 %v504
    %v862 = vpop.f32.mrb[0].mxu0
    %v863 = vadd.f32 %v786, %v862
    %v864 = vpop.f32.mrb[0].mxu0
    %v865 = vpop.f32.mrb[0].mxu0
    %v866 = vadd.f32 %v786, %v865
    %v867 = vpop.f32.mrb[0].mxu0
    %868 = vmatprep.mubr.bf16.mxu0 0
    %869 = vmatmul.mubr.bf16.gmra.mrb[0].mxu0 %v507
    %v870 = vpop.f32.mrb[0].mxu0
    %v871 = vadd.f32 %v786, %v870
    %v872 = vpop.f32.mrb[0].mxu0
    %v873 = vpop.f32.mrb[0].mxu0
    %v874 = vadd.f32 %v786, %v873
    %v875 = vpop.f32.mrb[0].mxu0
    %876 = vdwg.mxu0
    %v877 = vmax.f32 %v823, 0.0
    %v878 = vmax.f32 %v826, 0.0
    %v879 = vmax.f32 %v831, 0.0
    %v880 = vmax.f32 %v834, 0.0
    %v881 = vmax.f32 %v839, 0.0
    %v882 = vmax.f32 %v842, 0.0
    %v883 = vmax.f32 %v847, 0.0
    %v884 = vmax.f32 %v850, 0.0
    %v885 = vmax.f32 %v855, 0.0
    %v886 = vmax.f32 %v858, 0.0
    %v887 = vmax.f32 %v863, 0.0
    %v888 = vmax.f32 %v866, 0.0
    %v889 = vmax.f32 %v871, 0.0
    %v890 = vmax.f32 %v874, 0.0
    %v891 = vpack.c.bf16 %v878, %v877
    %v892 = vpack.c.bf16 %v880, %v879
    %v893 = vpack.c.bf16 %v882, %v881
    %v894 = vpack.c.bf16 %v884, %v883
    %v895 = vpack.c.bf16 %v886, %v885
    %v896 = vpack.c.bf16 %v888, %v887
    %v897 = vpack.c.bf16 %v890, %v889
    %s898 = scalar_lea.vmem [#allocation2], 192
    %v899 = vld [vmem:[%s898] sm:$0xf]
    %v900 = vld [vmem:[%s898 + $0x4] sm:$0xf]
    %v901 = vld [vmem:[%s898 + $0x8] sm:$0xf]
    %v902 = vld [vmem:[%s898 + $0xc] sm:$0xf]
    %v903 = vld [vmem:[%s898 + $0x10] sm:$0xf]
    %v904 = vld [vmem:[%s898 + $0x14] sm:$0xf]
    %v905 = vld [vmem:[%s898 + $0x18] sm:$0xf]
    %v906 = vld [vmem:[%s898 + $0x1c] sm:$0xf]
    %v907 = vld [vmem:[%s898 + $0x20] sm:$0xf]
    %v908 = vld [vmem:[%s898 + $0x24] sm:$0xf]
    %v909 = vld [vmem:[%s898 + $0x28] sm:$0xf]
    %v910 = vld [vmem:[%s898 + $0x2c] sm:$0xf]
    %v911 = vld [vmem:[%s898 + $0x30] sm:$0xf]
    %v912 = vld [vmem:[%s898 + $0x34] sm:$0xf]
    %v913 = vld [vmem:[%s898 + $0x38] sm:$0xf]
    %v914 = vld [vmem:[%s898 + $0x3c] sm:$0xf]
    %s915 = scalar_lea.vmem %s3, 3
    %v916 = vld [vmem:[%s915] sm:$0x1]
    %v918 = vlaneseq
    %v919 = vshrl.u32 %v918, 7
    %v920 = vsub.s32 0, %v919
    %v921 = vrot.slane %v916, %v920
    %v939 = vunpack.c.l.b16 %v899
    %v940 = vunpack.c.l.b16 %v900
    %v941 = vunpack.c.l.b16 %v901
    %v942 = vunpack.c.l.b16 %v902
    %v943 = vunpack.c.l.b16 %v903
    %v944 = vunpack.c.l.b16 %v904
    %v945 = vunpack.c.l.b16 %v905
    %v946 = vunpack.c.l.b16 %v906
    %v947 = vunpack.c.l.b16 %v907
    %v948 = vunpack.c.l.b16 %v908
    %v949 = vunpack.c.l.b16 %v909
    %v950 = vunpack.c.l.b16 %v910
    %v951 = vunpack.c.l.b16 %v911
    %v952 = vunpack.c.l.b16 %v912
    %v953 = vunpack.c.l.b16 %v913
    %v954 = vunpack.c.l.b16 %v914
    %v955 = vpack.c.b16 %v940, %v939
    %v956 = vpack.c.b16 %v942, %v941
    %v957 = vpack.c.b16 %v944, %v943
    %v958 = vpack.c.b16 %v946, %v945
    %v959 = vpack.c.b16 %v948, %v947
    %v960 = vpack.c.b16 %v950, %v949
    %v961 = vpack.c.b16 %v952, %v951
    %v962 = vpack.c.b16 %v954, %v953
    %971 = vmatprep.subr.bf16.mxu0 0
    %972 = vmatpush1.bf16.msra.mxu0 %v955
    %973 = vmatprep.subr.bf16.mxu0 0
    %974 = vmatpush1.bf16.msra.mxu0 %v956
    %975 = vmatprep.subr.bf16.mxu0 0
    %976 = vmatpush1.bf16.msra.mxu0 %v957
    %977 = vmatprep.subr.bf16.mxu0 0
    %978 = vmatpush1.bf16.msra.mxu0 %v958
    %979 = vmatprep.subr.bf16.mxu0 0
    %980 = vmatpush1.bf16.msra.mxu0 %v959
    %981 = vmatprep.subr.bf16.mxu0 0
    %982 = vmatpush1.bf16.msra.mxu0 %v960
    %983 = vmatprep.subr.bf16.mxu0 0
    %984 = vmatpush1.bf16.msra.mxu0 %v961
    %985 = vmatprep.subr.bf16.mxu0 0
    %986 = vmatpush1.bf16.msra.mxu0 %v962
    %987 = vmatprep.subr.bf16.mxu0 0
    %988 = vmatpush1.bf16.msra.mxu0 0
    %989 = vmatprep.subr.bf16.mxu0 0
    %990 = vmatpush1.bf16.msra.mxu0 0
    %991 = vmatprep.subr.bf16.mxu0 0
    %992 = vmatpush1.bf16.msra.mxu0 0
    %993 = vmatprep.subr.bf16.mxu0 0
    %994 = vmatpush1.bf16.msra.mxu0 0
    %995 = vmatprep.subr.bf16.mxu0 0
    %996 = vmatpush1.bf16.msra.mxu0 0
    %997 = vmatprep.subr.bf16.mxu0 0
    %998 = vmatpush1.bf16.msra.mxu0 0
    %999 = vmatprep.subr.bf16.mxu0 0
    %1000 = vmatpush1.bf16.msra.mxu0 0
    %1001 = vmatprep.subr.bf16.mxu0 0
    %1002 = vmatpush1.bf16.msra.mxu0 0
    %1003 = vmatprep.mubr.bf16.mxu0 0
    %1004 = vmatmul.mubr.bf16.gmra.mrb[0].mxu0 %v891
    %v1005 = vpop.f32.mrb[0].mxu0
    %v1006 = vadd.f32 %v921, %v1005
    %v1007 = vpop.f32.mrb[0].mxu0
    %v1008 = vpop.f32.mrb[0].mxu0
    %v1009 = vadd.f32 %v921, %v1008
    %v1010 = vpop.f32.mrb[0].mxu0
    %1011 = vmatprep.mubr.bf16.mxu0 0
    %1012 = vmatmul.mubr.bf16.gmra.mrb[0].mxu0 %v892
    %v1013 = vpop.f32.mrb[0].mxu0
    %v1014 = vadd.f32 %v921, %v1013
    %v1015 = vpop.f32.mrb[0].mxu0
    %v1016 = vpop.f32.mrb[0].mxu0
    %v1017 = vadd.f32 %v921, %v1016
    %v1018 = vpop.f32.mrb[0].mxu0
    %1019 = vmatprep.mubr.bf16.mxu0 0
    %1020 = vmatmul.mubr.bf16.gmra.mrb[0].mxu0 %v893
    %v1021 = vpop.f32.mrb[0].mxu0
    %v1022 = vadd.f32 %v921, %v1021
    %v1023 = vpop.f32.mrb[0].mxu0
    %v1024 = vpop.f32.mrb[0].mxu0
    %v1025 = vadd.f32 %v921, %v1024
    %v1026 = vpop.f32.mrb[0].mxu0
    %1027 = vmatprep.mubr.bf16.mxu0 0
    %1028 = vmatmul.mubr.bf16.gmra.mrb[0].mxu0 %v894
    %v1029 = vpop.f32.mrb[0].mxu0
    %v1030 = vadd.f32 %v921, %v1029
    %v1031 = vpop.f32.mrb[0].mxu0
    %v1032 = vpop.f32.mrb[0].mxu0
    %v1033 = vadd.f32 %v921, %v1032
    %v1034 = vpop.f32.mrb[0].mxu0
    %1035 = vmatprep.mubr.bf16.mxu0 0
    %1036 = vmatmul.mubr.bf16.gmra.mrb[0].mxu0 %v895
    %v1037 = vpop.f32.mrb[0].mxu0
    %v1038 = vadd.f32 %v921, %v1037
    %v1039 = vpop.f32.mrb[0].mxu0
    %v1040 = vpop.f32.mrb[0].mxu0
    %v1041 = vadd.f32 %v921, %v1040
    %v1042 = vpop.f32.mrb[0].mxu0
    %1043 = vmatprep.mubr.bf16.mxu0 0
    %1044 = vmatmul.mubr.bf16.gmra.mrb[0].mxu0 %v896
    %v1045 = vpop.f32.mrb[0].mxu0
    %v1046 = vadd.f32 %v921, %v1045
    %v1047 = vpop.f32.mrb[0].mxu0
    %v1048 = vpop.f32.mrb[0].mxu0
    %v1049 = vadd.f32 %v921, %v1048
    %v1050 = vpop.f32.mrb[0].mxu0
    %1051 = vmatprep.mubr.bf16.mxu0 0
    %1052 = vmatmul.mubr.bf16.gmra.mrb[0].mxu0 %v897
    %v1053 = vpop.f32.mrb[0].mxu0
    %v1054 = vadd.f32 %v921, %v1053
    %v1055 = vpop.f32.mrb[0].mxu0
    %v1056 = vpop.f32.mrb[0].mxu0
    %v1057 = vadd.f32 %v921, %v1056
    %v1058 = vpop.f32.mrb[0].mxu0
    %1059 = vdwg.mxu0
    %v1060 = vmax.f32 %v1006, 0.0
    %v1061 = vmax.f32 %v1009, 0.0
    %v1062 = vmax.f32 %v1014, 0.0
    %v1063 = vmax.f32 %v1017, 0.0
    %v1064 = vmax.f32 %v1022, 0.0
    %v1065 = vmax.f32 %v1025, 0.0
    %v1066 = vmax.f32 %v1030, 0.0
    %v1067 = vmax.f32 %v1033, 0.0
    %v1068 = vmax.f32 %v1038, 0.0
    %v1069 = vmax.f32 %v1041, 0.0
    %v1070 = vmax.f32 %v1046, 0.0
    %v1071 = vmax.f32 %v1049, 0.0
    %v1072 = vmax.f32 %v1054, 0.0
    %v1073 = vmax.f32 %v1057, 0.0
    %v1074 = vpack.c.bf16 %v1061, %v1060
    %v1075 = vpack.c.bf16 %v1063, %v1062
    %v1076 = vpack.c.bf16 %v1065, %v1064
    %v1077 = vpack.c.bf16 %v1067, %v1066
    %v1078 = vpack.c.bf16 %v1069, %v1068
    %v1079 = vpack.c.bf16 %v1071, %v1070
    %v1080 = vpack.c.bf16 %v1073, %v1072
    %s1081 = scalar_lea.vmem [#allocation2], 256
    %v1082 = vld [vmem:[%s1081] sm:$0xf]
    %v1083 = vld [vmem:[%s1081 + $0x4] sm:$0xf]
    %v1084 = vld [vmem:[%s1081 + $0x8] sm:$0xf]
    %v1085 = vld [vmem:[%s1081 + $0xc] sm:$0xf]
    %v1086 = vld [vmem:[%s1081 + $0x10] sm:$0xf]
    %v1087 = vld [vmem:[%s1081 + $0x14] sm:$0xf]
    %v1088 = vld [vmem:[%s1081 + $0x18] sm:$0xf]
    %v1089 = vld [vmem:[%s1081 + $0x1c] sm:$0xf]
    %v1090 = vld [vmem:[%s1081 + $0x20] sm:$0xf]
    %v1091 = vld [vmem:[%s1081 + $0x24] sm:$0xf]
    %v1092 = vld [vmem:[%s1081 + $0x28] sm:$0xf]
    %v1093 = vld [vmem:[%s1081 + $0x2c] sm:$0xf]
    %v1094 = vld [vmem:[%s1081 + $0x30] sm:$0xf]
    %v1095 = vld [vmem:[%s1081 + $0x34] sm:$0xf]
    %v1096 = vld [vmem:[%s1081 + $0x38] sm:$0xf]
    %v1097 = vld [vmem:[%s1081 + $0x3c] sm:$0xf]
    %s1098 = scalar_lea.vmem %s3, 4
    %v1099 = vld [vmem:[%s1098] sm:$0x1]
    %v1101 = vlaneseq
    %v1102 = vshrl.u32 %v1101, 7
    %v1103 = vsub.s32 0, %v1102
    %v1104 = vrot.slane %v1099, %v1103
    %v1122 = vunpack.c.l.b16 %v1082
    %v1123 = vunpack.c.l.b16 %v1083
    %v1124 = vunpack.c.l.b16 %v1084
    %v1125 = vunpack.c.l.b16 %v1085
    %v1126 = vunpack.c.l.b16 %v1086
    %v1127 = vunpack.c.l.b16 %v1087
    %v1128 = vunpack.c.l.b16 %v1088
    %v1129 = vunpack.c.l.b16 %v1089
    %v1130 = vunpack.c.l.b16 %v1090
    %v1131 = vunpack.c.l.b16 %v1091
    %v1132 = vunpack.c.l.b16 %v1092
    %v1133 = vunpack.c.l.b16 %v1093
    %v1134 = vunpack.c.l.b16 %v1094
    %v1135 = vunpack.c.l.b16 %v1095
    %v1136 = vunpack.c.l.b16 %v1096
    %v1137 = vunpack.c.l.b16 %v1097
    %v1138 = vpack.c.b16 %v1123, %v1122
    %v1139 = vpack.c.b16 %v1125, %v1124
    %v1140 = vpack.c.b16 %v1127, %v1126
    %v1141 = vpack.c.b16 %v1129, %v1128
    %v1142 = vpack.c.b16 %v1131, %v1130
    %v1143 = vpack.c.b16 %v1133, %v1132
    %v1144 = vpack.c.b16 %v1135, %v1134
    %v1145 = vpack.c.b16 %v1137, %v1136
    %1154 = vmatprep.subr.bf16.mxu0 0
    %1155 = vmatpush1.bf16.msra.mxu0 %v1138
    %1156 = vmatprep.subr.bf16.mxu0 0
    %1157 = vmatpush1.bf16.msra.mxu0 %v1139
    %1158 = vmatprep.subr.bf16.mxu0 0
    %1159 = vmatpush1.bf16.msra.mxu0 %v1140
    %1160 = vmatprep.subr.bf16.mxu0 0
    %1161 = vmatpush1.bf16.msra.mxu0 %v1141
    %1162 = vmatprep.subr.bf16.mxu0 0
    %1163 = vmatpush1.bf16.msra.mxu0 %v1142
    %1164 = vmatprep.subr.bf16.mxu0 0
    %1165 = vmatpush1.bf16.msra.mxu0 %v1143
    %1166 = vmatprep.subr.bf16.mxu0 0
    %1167 = vmatpush1.bf16.msra.mxu0 %v1144
    %1168 = vmatprep.subr.bf16.mxu0 0
    %1169 = vmatpush1.bf16.msra.mxu0 %v1145
    %1170 = vmatprep.subr.bf16.mxu0 0
    %1171 = vmatpush1.bf16.msra.mxu0 0
    %1172 = vmatprep.subr.bf16.mxu0 0
    %1173 = vmatpush1.bf16.msra.mxu0 0
    %1174 = vmatprep.subr.bf16.mxu0 0
    %1175 = vmatpush1.bf16.msra.mxu0 0
    %1176 = vmatprep.subr.bf16.mxu0 0
    %1177 = vmatpush1.bf16.msra.mxu0 0
    %1178 = vmatprep.subr.bf16.mxu0 0
    %1179 = vmatpush1.bf16.msra.mxu0 0
    %1180 = vmatprep.subr.bf16.mxu0 0
    %1181 = vmatpush1.bf16.msra.mxu0 0
    %1182 = vmatprep.subr.bf16.mxu0 0
    %1183 = vmatpush1.bf16.msra.mxu0 0
    %1184 = vmatprep.subr.bf16.mxu0 0
    %1185 = vmatpush1.bf16.msra.mxu0 0
    %1186 = vmatprep.mubr.bf16.mxu0 0
    %1187 = vmatmul.mubr.bf16.gmra.mrb[0].mxu0 %v1074
    %v1188 = vpop.f32.mrb[0].mxu0
    %v1189 = vadd.f32 %v1104, %v1188
    %v1190 = vpop.f32.mrb[0].mxu0
    %v1191 = vpop.f32.mrb[0].mxu0
    %v1192 = vadd.f32 %v1104, %v1191
    %v1193 = vpop.f32.mrb[0].mxu0
    %1194 = vmatprep.mubr.bf16.mxu0 0
    %1195 = vmatmul.mubr.bf16.gmra.mrb[0].mxu0 %v1075
    %v1196 = vpop.f32.mrb[0].mxu0
    %v1197 = vadd.f32 %v1104, %v1196
    %v1198 = vpop.f32.mrb[0].mxu0
    %v1199 = vpop.f32.mrb[0].mxu0
    %v1200 = vadd.f32 %v1104, %v1199
    %v1201 = vpop.f32.mrb[0].mxu0
    %1202 = vmatprep.mubr.bf16.mxu0 0
    %1203 = vmatmul.mubr.bf16.gmra.mrb[0].mxu0 %v1076
    %v1204 = vpop.f32.mrb[0].mxu0
    %v1205 = vadd.f32 %v1104, %v1204
    %v1206 = vpop.f32.mrb[0].mxu0
    %v1207 = vpop.f32.mrb[0].mxu0
    %v1208 = vadd.f32 %v1104, %v1207
    %v1209 = vpop.f32.mrb[0].mxu0
    %1210 = vmatprep.mubr.bf16.mxu0 0
    %1211 = vmatmul.mubr.bf16.gmra.mrb[0].mxu0 %v1077
    %v1212 = vpop.f32.mrb[0].mxu0
    %v1213 = vadd.f32 %v1104, %v1212
    %v1214 = vpop.f32.mrb[0].mxu0
    %v1215 = vpop.f32.mrb[0].mxu0
    %v1216 = vadd.f32 %v1104, %v1215
    %v1217 = vpop.f32.mrb[0].mxu0
    %1218 = vmatprep.mubr.bf16.mxu0 0
    %1219 = vmatmul.mubr.bf16.gmra.mrb[0].mxu0 %v1078
    %v1220 = vpop.f32.mrb[0].mxu0
    %v1221 = vadd.f32 %v1104, %v1220
    %v1222 = vpop.f32.mrb[0].mxu0
    %v1223 = vpop.f32.mrb[0].mxu0
    %v1224 = vadd.f32 %v1104, %v1223
    %v1225 = vpop.f32.mrb[0].mxu0
    %1226 = vmatprep.mubr.bf16.mxu0 0
    %1227 = vmatmul.mubr.bf16.gmra.mrb[0].mxu0 %v1079
    %v1228 = vpop.f32.mrb[0].mxu0
    %v1229 = vadd.f32 %v1104, %v1228
    %v1230 = vpop.f32.mrb[0].mxu0
    %v1231 = vpop.f32.mrb[0].mxu0
    %v1232 = vadd.f32 %v1104, %v1231
    %v1233 = vpop.f32.mrb[0].mxu0
    %1234 = vmatprep.mubr.bf16.mxu0 0
    %1235 = vmatmul.mubr.bf16.gmra.mrb[0].mxu0 %v1080
    %v1236 = vpop.f32.mrb[0].mxu0
    %v1237 = vadd.f32 %v1104, %v1236
    %v1238 = vpop.f32.mrb[0].mxu0
    %v1239 = vpop.f32.mrb[0].mxu0
    %v1240 = vadd.f32 %v1104, %v1239
    %v1241 = vpop.f32.mrb[0].mxu0
    %1242 = vdwg.mxu0
    %v1243 = vpack.c.bf16 %v1192, %v1189
    %v1244 = vpack.c.bf16 %v1200, %v1197
    %v1245 = vpack.c.bf16 %v1208, %v1205
    %v1246 = vpack.c.bf16 %v1216, %v1213
    %v1247 = vpack.c.bf16 %v1224, %v1221
    %v1248 = vpack.c.bf16 %v1232, %v1229
    %v1249 = vpack.c.bf16 %v1240, %v1237
    %v1257 = vunpack.c.l.b16 %v1243
    %v1258 = vunpack.c.h.b16 %v1243
    %v1259 = vunpack.c.l.b16 %v1244
    %v1260 = vunpack.c.h.b16 %v1244
    %v1261 = vunpack.c.l.b16 %v1245
    %v1262 = vunpack.c.h.b16 %v1245
    %v1263 = vunpack.c.l.b16 %v1246
    %v1264 = vunpack.c.h.b16 %v1246
    %v1265 = vunpack.c.l.b16 %v1247
    %v1266 = vunpack.c.h.b16 %v1247
    %v1267 = vunpack.c.l.b16 %v1248
    %v1268 = vunpack.c.h.b16 %v1248
    %v1269 = vunpack.c.l.b16 %v1249
    %v1270 = vunpack.c.h.b16 %v1249
    %v1271 = vpack.c.b16 %v1257, %v1257
    %v1272 = vpack.c.b16 %v1258, %v1258
    %v1273 = vpack.c.b16 %v1259, %v1259
    %v1274 = vpack.c.b16 %v1260, %v1260
    %v1275 = vpack.c.b16 %v1261, %v1261
    %v1276 = vpack.c.b16 %v1262, %v1262
    %v1277 = vpack.c.b16 %v1263, %v1263
    %v1278 = vpack.c.b16 %v1264, %v1264
    %v1279 = vpack.c.b16 %v1265, %v1265
    %v1280 = vpack.c.b16 %v1266, %v1266
    %v1281 = vpack.c.b16 %v1267, %v1267
    %v1282 = vpack.c.b16 %v1268, %v1268
    %v1283 = vpack.c.b16 %v1269, %v1269
    %v1284 = vpack.c.b16 %v1270, %v1270
    %1299 = vst [vmem:[%s4] sm:$0xf] %v1271
    %1300 = vst [vmem:[%s4 + $0x4] sm:$0xf] %v1272
    %1301 = vst [vmem:[%s4 + $0x8] sm:$0xf] %v1273
    %1302 = vst [vmem:[%s4 + $0xc] sm:$0xf] %v1274
    %1303 = vst [vmem:[%s4 + $0x10] sm:$0xf] %v1275
    %1304 = vst [vmem:[%s4 + $0x14] sm:$0xf] %v1276
    %1305 = vst [vmem:[%s4 + $0x18] sm:$0xf] %v1277
    %1306 = vst [vmem:[%s4 + $0x1c] sm:$0xf] %v1278
    %1307 = vst [vmem:[%s4 + $0x20] sm:$0xf] %v1279
    %1308 = vst [vmem:[%s4 + $0x24] sm:$0xf] %v1280
    %1309 = vst [vmem:[%s4 + $0x28] sm:$0xf] %v1281
    %1310 = vst [vmem:[%s4 + $0x2c] sm:$0xf] %v1282
    %1311 = vst [vmem:[%s4 + $0x30] sm:$0xf] %v1283
    %1312 = vst [vmem:[%s4 + $0x34] sm:$0xf] %v1284
    // Predicated region
    $region22: #{gcn_forward.1} parent=1 // pred_check
      _
    $region23: #{gcn_forward.1} parent=1 // pred_check_branch
      %1314 = sbr.rel (0) target = $region25
    $region24: #{gcn_forward.1} parent=1 // pred_region
      _
    $region25: #{gcn_forward.1} parent=1 // pred_fallthru
      _
    // Predicated region
    $region26: #{gcn_forward.1} parent=1 // pred_check
      _
    $region27: #{gcn_forward.1} parent=1 // pred_check_branch
      %1316 = sbr.rel (0) target = $region29
    $region28: #{gcn_forward.1} parent=1 // pred_region
      _
    $region29: #{gcn_forward.1} parent=1 // pred_fallthru
      _
    %1317 = vsyncpa [#allocation3], 1

</llo_original>
